<compile_context>
chip_gen: v6e
topology: v6e:2x2x1
jax: 0.10.0
libtpu: 0.0.40
codegen_flags: <defaults>
</compile_context>

<pallas_src>
import functools

import numpy as np
import jax
import jax.numpy as jnp
from jax import lax
from jax.experimental import pallas as pl
from jax.experimental.pallas import tpu as pltpu


# ----------------------------------------------------------------------------
# Parameter setup (mirrors TpsGridGen.__init__ / compute_L_inverse) — pure glue.
# ----------------------------------------------------------------------------
def _control_points(grid_size: int):
    axis_coords = np.linspace(-1.0, 1.0, grid_size)
    # Same convention as the torch module: P_Y, P_X = np.meshgrid(ax, ax)
    P_Y, P_X = np.meshgrid(axis_coords, axis_coords)
    return P_X.reshape(-1).astype(np.float64), P_Y.reshape(-1).astype(np.float64)


def _compute_L_inverse(P_X: np.ndarray, P_Y: np.ndarray) -> np.ndarray:
    # TODO(synk): torch.inverse has no in-kernel Pallas equivalent; the
    # (N+3)x(N+3) inversion is a one-time __init__ constant, computed with numpy.
    N = P_X.shape[0]
    Xmat = np.tile(P_X[:, None], (1, N))
    Ymat = np.tile(P_Y[:, None], (1, N))
    d2 = (Xmat - Xmat.T) ** 2 + (Ymat - Ymat.T) ** 2
    d2[d2 == 0] = 1.0
    K = d2 * np.log(d2)
    O = np.ones((N, 1))
    Z = np.zeros((3, 3))
    P = np.concatenate([O, P_X[:, None], P_Y[:, None]], axis=1)
    L = np.concatenate(
        [np.concatenate([K, P], axis=1), np.concatenate([P.T, Z], axis=1)], axis=0
    )
    return np.linalg.inv(L).astype(np.float32)  # [N+3, N+3]


def _tps_coefficients(theta, li_left, n):
    """C[b] = Li[:, :N] @ Q[b] for X and Y, done element-wise (full f32 on VPU,
    no default-precision bf16 matmul).  Returns [B, 2*(N+3)]: (W_X, A_X, W_Y, A_Y)."""
    qx = theta[:, :n]                                             # [B, N]
    qy = theta[:, n:]                                             # [B, N]
    cx = jnp.sum(li_left[None, :, :] * qx[:, None, :], axis=-1)   # [B, N+3]
    cy = jnp.sum(li_left[None, :, :] * qy[:, None, :], axis=-1)   # [B, N+3]
    return jnp.concatenate([cx, cy], axis=-1)                     # [B, 2*(N+3)]


# ----------------------------------------------------------------------------
# Pallas kernel: per (batch, row-tile) compute the TPS warp.
# ----------------------------------------------------------------------------
def _tps_kernel(coef_ref, out_ref, *, n, out_h, out_w, tile_h, ux, uy, ix, iy):
    b = pl.program_id(0)   # batch index
    t = pl.program_id(1)   # row-tile index
    w_pad = out_ref.shape[-1]

    # ---- regular sampling grid (linspace(-1,1,H/W)) via iota, pre-folded scale
    sy = np.float32(2.0 / (out_h - 1))
    sx = np.float32(2.0 / (out_w - 1))
    rows = (t * tile_h
            + lax.broadcasted_iota(jnp.int32, (tile_h, w_pad), 0)).astype(jnp.float32)
    cols = lax.broadcasted_iota(jnp.int32, (tile_h, w_pad), 1).astype(jnp.float32)
    gy = rows * sy - 1.0        # grid_Y (rows >= out_h are padding, sliced later)
    gx = cols * sx - 1.0        # grid_X (cols >= out_w are padding, sliced later)

    nc = n + 3
    # ---- affine part: A[0] + A[1]*x + A[2]*y (SMEM scalar reads) --------------
    accx = coef_ref[b, n] + coef_ref[b, n + 1] * gx + coef_ref[b, n + 2] * gy
    accy = (coef_ref[b, nc + n] + coef_ref[b, nc + n + 1] * gx
            + coef_ref[b, nc + n + 2] * gy)

    # ---- hoisted unique squared distances (meshgrid structure) ----------------
    # log(0) guard (1e-30) folded into dxsq so the inner loop has no clamp.
    dxsq = []
    for j in range(len(ux)):
        dx = gx - np.float32(ux[j])
        dxsq.append(dx * dx + np.float32(1e-30))
    dysq = []
    for k in range(len(uy)):
        dy = gy - np.float32(uy[k])
        dysq.append(dy * dy)

    # ---- TPS radial basis: sum_i W_i * d_i^2 log d_i^2 ------------------------
    for i in range(n):                                   # N is small & static
        d2 = dxsq[ix[i]] + dysq[iy[i]]
        u = d2 * jnp.log(d2)
        accx = accx + coef_ref[b, i] * u
        accy = accy + coef_ref[b, nc + i] * u

    out_ref[0, :, :] = accx
    out_ref[1, :, :] = accy


# ----------------------------------------------------------------------------
# Tiling heuristics
# ----------------------------------------------------------------------------
_N_TILE_TEMPS = 8   # approx tile-sized f32 temporaries live at once (gx, gy,
                    # accx, accy, dxsq/dysq arrays, d2/u)


def _vmem_capacity_bytes():
    try:
        return int(pltpu.get_tpu_info().vmem_capacity_bytes)
    except Exception:
        return 64 << 20   # conservative: v7x per-TensorCore physical VMEM


def _pick_tile_h(out_h, batch, w_pad, vmem_capacity):
    """Pick (tile_h, h_pad): tile_h is a multiple of 8 dividing h_pad, sized so
    the output double buffer plus elementwise temporaries fit in VMEM, and the
    total parallel step count is >=2 and even where cheap (v7x has 2 TCs)."""
    h_pad = ((out_h + 7) // 8) * 8
    bytes_per_row = (2 * 2 + _N_TILE_TEMPS) * w_pad * 4     # planes*dblbuf + temps
    budget = max(1 << 20, int(vmem_capacity * 0.6))         # leave headroom
    vmem_rows = max(8, budget // bytes_per_row)
    cap = min(h_pad, vmem_rows)

    best = 8
    th = 8
    while th <= cap:
        if h_pad % th == 0:
            best = th
        th += 8

    steps = batch * (h_pad // best)
    if steps < 2 or (steps % 2 == 1 and steps <= 8):
        half = best // 2
        if half >= 8 and half % 8 == 0 and h_pad % half == 0:
            best = half
    return best, h_pad


# ----------------------------------------------------------------------------
# Wrappers
# ----------------------------------------------------------------------------
def tps_grid_gen_planes(theta, *, out_h, out_w, grid_size=3, tile_h=None):
    """Returns the warped grid as planes [B, 2, H, W] (0 = x', 1 = y').
    Preferred API: avoids the extra HBM pass of the [B,H,W,2] transpose."""
    theta = jnp.asarray(theta, jnp.float32)
    if theta.ndim == 4:                                  # [B, 2N, 1, 1] -> [B, 2N]
        theta = theta[:, :, 0, 0]
    B = theta.shape[0]
    N = grid_size * grid_size
    assert theta.shape[1] == 2 * N
    assert out_h > 1 and out_w > 1, "degenerate linspace (out_h/out_w == 1) unsupported"

    px, py = _control_points(grid_size)
    Li = _compute_L_inverse(px, py)                      # [N+3, N+3] f32
    li_left = jnp.asarray(Li[:, :N])                     # [N+3, N]

    # Hoisted coefficient solve -> tiny SMEM array for the kernel.
    coef = _tps_coefficients(theta, li_left, N)          # [B, 2*(N+3)]

    # Meshgrid structure: only grid_size distinct x / y control coordinates.
    ux, ix = np.unique(px, return_inverse=True)
    uy, iy = np.unique(py, return_inverse=True)

    # TODO(synk): out_w not a multiple of 128 wastes (w_pad-out_w)/w_pad of the
    # VALU/EUP work on padded lanes; callers should prefer out_w % 128 == 0.
    w_pad = ((out_w + 127) // 128) * 128                 # lane-dense stores
    vmem_cap = _vmem_capacity_bytes()
    if tile_h is None:
        tile_h, h_pad = _pick_tile_h(out_h, B, w_pad, vmem_cap)
    else:
        h_pad = ((out_h + 7) // 8) * 8
        assert h_pad % tile_h == 0
        assert tile_h % 8 == 0 or tile_h == h_pad

    kernel = functools.partial(
        _tps_kernel, n=N, out_h=out_h, out_w=out_w, tile_h=tile_h,
        ux=tuple(float(v) for v in ux), uy=tuple(float(v) for v in uy),
        ix=tuple(int(v) for v in ix), iy=tuple(int(v) for v in iy))

    # Device-aware VMEM limit: output double buffer + elementwise temporaries,
    # clamped below the physical capacity (64 MiB on v7x, 128 MiB on v5e/v6e).
    tile_bytes = (2 * 2 + _N_TILE_TEMPS) * tile_h * w_pad * 4
    vmem_limit = int(min(max(tile_bytes, 8 << 20), max(vmem_cap - (8 << 20), 4 << 20)))

    planes = pl.pallas_call(
        kernel,
        out_shape=jax.ShapeDtypeStruct((B, 2, h_pad, w_pad), jnp.float32),
        grid_spec=pltpu.PrefetchScalarGridSpec(
            num_scalar_prefetch=0,
            grid=(B, h_pad // tile_h),
            in_specs=[
                pl.BlockSpec(memory_space=pltpu.MemorySpace.SMEM),   # coefficients
            ],
            out_specs=pl.BlockSpec((None, 2, tile_h, w_pad),
                                   lambda b, t: (b, 0, t, 0)),
        ),
        compiler_params=pltpu.CompilerParams(
            dimension_semantics=("parallel", "parallel"),
            vmem_limit_bytes=vmem_limit),
    )(coef)

    if h_pad != out_h or w_pad != out_w:
        planes = planes[:, :, :out_h, :out_w]
    return planes                                        # [B, 2, H, W]


def tps_grid_gen(theta, *, out_h, out_w, grid_size=3, tile_h=None):
    """PyTorch-compatible layout [B, H, W, 2] (x', y')."""
    planes = tps_grid_gen_planes(theta, out_h=out_h, out_w=out_w,
                                 grid_size=grid_size, tile_h=tile_h)
    # TODO(synk): this transpose to the torch [B,H,W,2] layout is an extra HBM
    # pass; consumers that can take [B,2,H,W] should use tps_grid_gen_planes.
    return jnp.moveaxis(planes, 1, -1)                   # [B, H, W, 2]


# ----------------------------------------------------------------------------
# Pure-JAX reference (mirrors apply_transformation).  Element-wise f32 only —
# no matmul/einsum — so no TPU default-precision (bf16) ambiguity.
# ----------------------------------------------------------------------------
def tps_ref(theta, *, out_h, out_w, grid_size=3):
    theta = jnp.asarray(theta, jnp.float32)
    if theta.ndim == 4:
        theta = theta[:, :, 0, 0]
    N = grid_size * grid_size
    px, py = _control_points(grid_size)
    Li = _compute_L_inverse(px, py)
    li_left = jnp.asarray(Li[:, :N])                     # [N+3, N]

    coef = _tps_coefficients(theta, li_left, N)          # [B, 2*(N+3)]
    cx, cy = coef[:, :N + 3], coef[:, N + 3:]
    wx, ax = cx[:, :N], cx[:, N:]
    wy, ay = cy[:, :N], cy[:, N:]

    rows = jnp.arange(out_h, dtype=jnp.float32)
    cols = jnp.arange(out_w, dtype=jnp.float32)
    gy = -1.0 + 2.0 * rows / np.float32(out_h - 1)
    gx = -1.0 + 2.0 * cols / np.float32(out_w - 1)
    GX = jnp.broadcast_to(gx[None, :], (out_h, out_w))
    GY = jnp.broadcast_to(gy[:, None], (out_h, out_w))

    PX = jnp.asarray(px, jnp.float32)
    PY = jnp.asarray(py, jnp.float32)
    d2 = (GX[..., None] - PX) ** 2 + (GY[..., None] - PY) ** 2   # [H, W, N]
    d2 = jnp.where(d2 == 0.0, 1.0, d2)
    U = d2 * jnp.log(d2)

    tps_x = jnp.sum(U[None] * wx[:, None, None, :], axis=-1)     # [B, H, W]
    tps_y = jnp.sum(U[None] * wy[:, None, None, :], axis=-1)
    Xp = (ax[:, 0, None, None] + ax[:, 1, None, None] * GX
          + ax[:, 2, None, None] * GY + tps_x)
    Yp = (ay[:, 0, None, None] + ay[:, 1, None, None] * GX
          + ay[:, 2, None, None] * GY + tps_y)
    return jnp.stack([Xp, Yp], axis=-1)                  # [B, H, W, 2]


if __name__ == "__main__":
    B, grid_size = 2, 3
    out_h, out_w = 16, 128
    N = grid_size * grid_size

    key = jax.random.PRNGKey(0)
    # theta: regressed TPS parameters (X displacements then Y displacements).
    theta = 0.1 * jax.random.normal(key, (B, 2 * N), dtype=jnp.float32)

    out = tps_grid_gen(theta, out_h=out_h, out_w=out_w, grid_size=grid_size)
    out = jax.block_until_ready(out)
    assert out.shape == (B, out_h, out_w, 2)

    ref = tps_ref(theta, out_h=out_h, out_w=out_w, grid_size=grid_size)
    assert np.allclose(np.asarray(out), np.asarray(ref), atol=2e-4, rtol=2e-4), \
        "Pallas kernel mismatch vs reference"

    # Planes API (preferred, no transpose HBM pass) must match too.
    planes = jax.block_until_ready(
        tps_grid_gen_planes(theta, out_h=out_h, out_w=out_w, grid_size=grid_size))
    assert np.allclose(np.asarray(planes),
                       np.moveaxis(np.asarray(ref), -1, 1), atol=2e-4, rtol=2e-4)

    print("KERNEL_OK")
</pallas_src>

<mosaic_0001>
module attributes {stable_mosaic.version = 11 : i64} {
  func.func @_tps_kernel(%arg0: i32, %arg1: i32, %arg2: memref<2x24xf32, #tpu.memory_space<smem>>, %arg3: memref<1x2x16x128xf32, #tpu.memory_space<vmem>>) attributes {dimension_semantics = [#tpu.dimension_semantics<parallel>, #tpu.dimension_semantics<parallel>], iteration_bounds = array<i64: 2, 1>, scalar_prefetch = 0 : i64, scratch_operands = 0 : i64, tpu.core_type = #tpu.core_type<tc>, window_params = [{transform_indices = @transform_0, window_bounds = array<i64: 2, 24>}, {transform_indices = @transform_1, window_bounds = array<i64: 1, 2, 16, 128>}]} {
    %c16_i32 = arith.constant 16 : i32
    %0 = arith.muli %arg1, %c16_i32 : i32
    %1 = tpu.iota {dimensions = array<i32: 0>} : vector<16x128xi32>
    %2 = vector.broadcast %0 : i32 to vector<16x128xi32>
    %3 = arith.addi %2, %1 : vector<16x128xi32>
    %4 = arith.sitofp %3 : vector<16x128xi32> to vector<16x128xf32>
    %5 = tpu.iota {dimensions = array<i32: 1>} : vector<16x128xi32>
    %6 = arith.sitofp %5 : vector<16x128xi32> to vector<16x128xf32>
    %cst = arith.constant 0.13333334 : f32
    %7 = vector.broadcast %cst : f32 to vector<16x128xf32>
    %8 = arith.mulf %4, %7 : vector<16x128xf32>
    %cst_0 = arith.constant 1.000000e+00 : f32
    %9 = vector.broadcast %cst_0 : f32 to vector<16x128xf32>
    %10 = arith.subf %8, %9 : vector<16x128xf32>
    %cst_1 = arith.constant 0.0157480314 : f32
    %11 = vector.broadcast %cst_1 : f32 to vector<16x128xf32>
    %12 = arith.mulf %6, %11 : vector<16x128xf32>
    %cst_2 = arith.constant 1.000000e+00 : f32
    %13 = vector.broadcast %cst_2 : f32 to vector<16x128xf32>
    %14 = arith.subf %12, %13 : vector<16x128xf32>
    %15 = arith.index_cast %arg0 : i32 to index
    %c9 = arith.constant 9 : index
    %16 = memref.load %arg2[%15, %c9] : memref<2x24xf32, #tpu.memory_space<smem>>
    %17 = arith.index_cast %arg0 : i32 to index
    %c10 = arith.constant 10 : index
    %18 = memref.load %arg2[%17, %c10] : memref<2x24xf32, #tpu.memory_space<smem>>
    %19 = vector.broadcast %18 : f32 to vector<16x128xf32>
    %20 = arith.mulf %19, %14 : vector<16x128xf32>
    %21 = vector.broadcast %16 : f32 to vector<16x128xf32>
    %22 = arith.addf %21, %20 : vector<16x128xf32>
    %23 = arith.index_cast %arg0 : i32 to index
    %c11 = arith.constant 11 : index
    %24 = memref.load %arg2[%23, %c11] : memref<2x24xf32, #tpu.memory_space<smem>>
    %25 = vector.broadcast %24 : f32 to vector<16x128xf32>
    %26 = arith.mulf %25, %10 : vector<16x128xf32>
    %27 = arith.addf %22, %26 : vector<16x128xf32>
    %28 = arith.index_cast %arg0 : i32 to index
    %c21 = arith.constant 21 : index
    %29 = memref.load %arg2[%28, %c21] : memref<2x24xf32, #tpu.memory_space<smem>>
    %30 = arith.index_cast %arg0 : i32 to index
    %c22 = arith.constant 22 : index
    %31 = memref.load %arg2[%30, %c22] : memref<2x24xf32, #tpu.memory_space<smem>>
    %32 = vector.broadcast %31 : f32 to vector<16x128xf32>
    %33 = arith.mulf %32, %14 : vector<16x128xf32>
    %34 = vector.broadcast %29 : f32 to vector<16x128xf32>
    %35 = arith.addf %34, %33 : vector<16x128xf32>
    %36 = arith.index_cast %arg0 : i32 to index
    %c23 = arith.constant 23 : index
    %37 = memref.load %arg2[%36, %c23] : memref<2x24xf32, #tpu.memory_space<smem>>
    %38 = vector.broadcast %37 : f32 to vector<16x128xf32>
    %39 = arith.mulf %38, %10 : vector<16x128xf32>
    %40 = arith.addf %35, %39 : vector<16x128xf32>
    %cst_3 = arith.constant -1.000000e+00 : f32
    %41 = vector.broadcast %cst_3 : f32 to vector<16x128xf32>
    %42 = arith.subf %14, %41 : vector<16x128xf32>
    %43 = arith.mulf %42, %42 : vector<16x128xf32>
    %cst_4 = arith.constant 1.000000e-30 : f32
    %44 = vector.broadcast %cst_4 : f32 to vector<16x128xf32>
    %45 = arith.addf %43, %44 : vector<16x128xf32>
    %cst_5 = arith.constant 0.000000e+00 : f32
    %46 = vector.broadcast %cst_5 : f32 to vector<16x128xf32>
    %47 = arith.subf %14, %46 : vector<16x128xf32>
    %48 = arith.mulf %47, %47 : vector<16x128xf32>
    %cst_6 = arith.constant 1.000000e-30 : f32
    %49 = vector.broadcast %cst_6 : f32 to vector<16x128xf32>
    %50 = arith.addf %48, %49 : vector<16x128xf32>
    %cst_7 = arith.constant 1.000000e+00 : f32
    %51 = vector.broadcast %cst_7 : f32 to vector<16x128xf32>
    %52 = arith.subf %14, %51 : vector<16x128xf32>
    %53 = arith.mulf %52, %52 : vector<16x128xf32>
    %cst_8 = arith.constant 1.000000e-30 : f32
    %54 = vector.broadcast %cst_8 : f32 to vector<16x128xf32>
    %55 = arith.addf %53, %54 : vector<16x128xf32>
    %cst_9 = arith.constant -1.000000e+00 : f32
    %56 = vector.broadcast %cst_9 : f32 to vector<16x128xf32>
    %57 = arith.subf %10, %56 : vector<16x128xf32>
    %58 = arith.mulf %57, %57 : vector<16x128xf32>
    %cst_10 = arith.constant 0.000000e+00 : f32
    %59 = vector.broadcast %cst_10 : f32 to vector<16x128xf32>
    %60 = arith.subf %10, %59 : vector<16x128xf32>
    %61 = arith.mulf %60, %60 : vector<16x128xf32>
    %cst_11 = arith.constant 1.000000e+00 : f32
    %62 = vector.broadcast %cst_11 : f32 to vector<16x128xf32>
    %63 = arith.subf %10, %62 : vector<16x128xf32>
    %64 = arith.mulf %63, %63 : vector<16x128xf32>
    %65 = arith.addf %45, %58 : vector<16x128xf32>
    %66 = math.log %65 : vector<16x128xf32>
    %67 = arith.mulf %65, %66 : vector<16x128xf32>
    %68 = arith.index_cast %arg0 : i32 to index
    %c0 = arith.constant 0 : index
    %69 = memref.load %arg2[%68, %c0] : memref<2x24xf32, #tpu.memory_space<smem>>
    %70 = vector.broadcast %69 : f32 to vector<16x128xf32>
    %71 = arith.mulf %70, %67 : vector<16x128xf32>
    %72 = arith.addf %27, %71 : vector<16x128xf32>
    %73 = arith.index_cast %arg0 : i32 to index
    %c12 = arith.constant 12 : index
    %74 = memref.load %arg2[%73, %c12] : memref<2x24xf32, #tpu.memory_space<smem>>
    %75 = vector.broadcast %74 : f32 to vector<16x128xf32>
    %76 = arith.mulf %75, %67 : vector<16x128xf32>
    %77 = arith.addf %40, %76 : vector<16x128xf32>
    %78 = arith.addf %45, %61 : vector<16x128xf32>
    %79 = math.log %78 : vector<16x128xf32>
    %80 = arith.mulf %78, %79 : vector<16x128xf32>
    %81 = arith.index_cast %arg0 : i32 to index
    %c1 = arith.constant 1 : index
    %82 = memref.load %arg2[%81, %c1] : memref<2x24xf32, #tpu.memory_space<smem>>
    %83 = vector.broadcast %82 : f32 to vector<16x128xf32>
    %84 = arith.mulf %83, %80 : vector<16x128xf32>
    %85 = arith.addf %72, %84 : vector<16x128xf32>
    %86 = arith.index_cast %arg0 : i32 to index
    %c13 = arith.constant 13 : index
    %87 = memref.load %arg2[%86, %c13] : memref<2x24xf32, #tpu.memory_space<smem>>
    %88 = vector.broadcast %87 : f32 to vector<16x128xf32>
    %89 = arith.mulf %88, %80 : vector<16x128xf32>
    %90 = arith.addf %77, %89 : vector<16x128xf32>
    %91 = arith.addf %45, %64 : vector<16x128xf32>
    %92 = math.log %91 : vector<16x128xf32>
    %93 = arith.mulf %91, %92 : vector<16x128xf32>
    %94 = arith.index_cast %arg0 : i32 to index
    %c2 = arith.constant 2 : index
    %95 = memref.load %arg2[%94, %c2] : memref<2x24xf32, #tpu.memory_space<smem>>
    %96 = vector.broadcast %95 : f32 to vector<16x128xf32>
    %97 = arith.mulf %96, %93 : vector<16x128xf32>
    %98 = arith.addf %85, %97 : vector<16x128xf32>
    %99 = arith.index_cast %arg0 : i32 to index
    %c14 = arith.constant 14 : index
    %100 = memref.load %arg2[%99, %c14] : memref<2x24xf32, #tpu.memory_space<smem>>
    %101 = vector.broadcast %100 : f32 to vector<16x128xf32>
    %102 = arith.mulf %101, %93 : vector<16x128xf32>
    %103 = arith.addf %90, %102 : vector<16x128xf32>
    %104 = arith.addf %50, %58 : vector<16x128xf32>
    %105 = math.log %104 : vector<16x128xf32>
    %106 = arith.mulf %104, %105 : vector<16x128xf32>
    %107 = arith.index_cast %arg0 : i32 to index
    %c3 = arith.constant 3 : index
    %108 = memref.load %arg2[%107, %c3] : memref<2x24xf32, #tpu.memory_space<smem>>
    %109 = vector.broadcast %108 : f32 to vector<16x128xf32>
    %110 = arith.mulf %109, %106 : vector<16x128xf32>
    %111 = arith.addf %98, %110 : vector<16x128xf32>
    %112 = arith.index_cast %arg0 : i32 to index
    %c15 = arith.constant 15 : index
    %113 = memref.load %arg2[%112, %c15] : memref<2x24xf32, #tpu.memory_space<smem>>
    %114 = vector.broadcast %113 : f32 to vector<16x128xf32>
    %115 = arith.mulf %114, %106 : vector<16x128xf32>
    %116 = arith.addf %103, %115 : vector<16x128xf32>
    %117 = arith.addf %50, %61 : vector<16x128xf32>
    %118 = math.log %117 : vector<16x128xf32>
    %119 = arith.mulf %117, %118 : vector<16x128xf32>
    %120 = arith.index_cast %arg0 : i32 to index
    %c4 = arith.constant 4 : index
    %121 = memref.load %arg2[%120, %c4] : memref<2x24xf32, #tpu.memory_space<smem>>
    %122 = vector.broadcast %121 : f32 to vector<16x128xf32>
    %123 = arith.mulf %122, %119 : vector<16x128xf32>
    %124 = arith.addf %111, %123 : vector<16x128xf32>
    %125 = arith.index_cast %arg0 : i32 to index
    %c16 = arith.constant 16 : index
    %126 = memref.load %arg2[%125, %c16] : memref<2x24xf32, #tpu.memory_space<smem>>
    %127 = vector.broadcast %126 : f32 to vector<16x128xf32>
    %128 = arith.mulf %127, %119 : vector<16x128xf32>
    %129 = arith.addf %116, %128 : vector<16x128xf32>
    %130 = arith.addf %50, %64 : vector<16x128xf32>
    %131 = math.log %130 : vector<16x128xf32>
    %132 = arith.mulf %130, %131 : vector<16x128xf32>
    %133 = arith.index_cast %arg0 : i32 to index
    %c5 = arith.constant 5 : index
    %134 = memref.load %arg2[%133, %c5] : memref<2x24xf32, #tpu.memory_space<smem>>
    %135 = vector.broadcast %134 : f32 to vector<16x128xf32>
    %136 = arith.mulf %135, %132 : vector<16x128xf32>
    %137 = arith.addf %124, %136 : vector<16x128xf32>
    %138 = arith.index_cast %arg0 : i32 to index
    %c17 = arith.constant 17 : index
    %139 = memref.load %arg2[%138, %c17] : memref<2x24xf32, #tpu.memory_space<smem>>
    %140 = vector.broadcast %139 : f32 to vector<16x128xf32>
    %141 = arith.mulf %140, %132 : vector<16x128xf32>
    %142 = arith.addf %129, %141 : vector<16x128xf32>
    %143 = arith.addf %55, %58 : vector<16x128xf32>
    %144 = math.log %143 : vector<16x128xf32>
    %145 = arith.mulf %143, %144 : vector<16x128xf32>
    %146 = arith.index_cast %arg0 : i32 to index
    %c6 = arith.constant 6 : index
    %147 = memref.load %arg2[%146, %c6] : memref<2x24xf32, #tpu.memory_space<smem>>
    %148 = vector.broadcast %147 : f32 to vector<16x128xf32>
    %149 = arith.mulf %148, %145 : vector<16x128xf32>
    %150 = arith.addf %137, %149 : vector<16x128xf32>
    %151 = arith.index_cast %arg0 : i32 to index
    %c18 = arith.constant 18 : index
    %152 = memref.load %arg2[%151, %c18] : memref<2x24xf32, #tpu.memory_space<smem>>
    %153 = vector.broadcast %152 : f32 to vector<16x128xf32>
    %154 = arith.mulf %153, %145 : vector<16x128xf32>
    %155 = arith.addf %142, %154 : vector<16x128xf32>
    %156 = arith.addf %55, %61 : vector<16x128xf32>
    %157 = math.log %156 : vector<16x128xf32>
    %158 = arith.mulf %156, %157 : vector<16x128xf32>
    %159 = arith.index_cast %arg0 : i32 to index
    %c7 = arith.constant 7 : index
    %160 = memref.load %arg2[%159, %c7] : memref<2x24xf32, #tpu.memory_space<smem>>
    %161 = vector.broadcast %160 : f32 to vector<16x128xf32>
    %162 = arith.mulf %161, %158 : vector<16x128xf32>
    %163 = arith.addf %150, %162 : vector<16x128xf32>
    %164 = arith.index_cast %arg0 : i32 to index
    %c19 = arith.constant 19 : index
    %165 = memref.load %arg2[%164, %c19] : memref<2x24xf32, #tpu.memory_space<smem>>
    %166 = vector.broadcast %165 : f32 to vector<16x128xf32>
    %167 = arith.mulf %166, %158 : vector<16x128xf32>
    %168 = arith.addf %155, %167 : vector<16x128xf32>
    %169 = arith.addf %55, %64 : vector<16x128xf32>
    %170 = math.log %169 : vector<16x128xf32>
    %171 = arith.mulf %169, %170 : vector<16x128xf32>
    %172 = arith.index_cast %arg0 : i32 to index
    %c8 = arith.constant 8 : index
    %173 = memref.load %arg2[%172, %c8] : memref<2x24xf32, #tpu.memory_space<smem>>
    %174 = vector.broadcast %173 : f32 to vector<16x128xf32>
    %175 = arith.mulf %174, %171 : vector<16x128xf32>
    %176 = arith.addf %163, %175 : vector<16x128xf32>
    %177 = arith.index_cast %arg0 : i32 to index
    %c20 = arith.constant 20 : index
    %178 = memref.load %arg2[%177, %c20] : memref<2x24xf32, #tpu.memory_space<smem>>
    %179 = vector.broadcast %178 : f32 to vector<16x128xf32>
    %180 = arith.mulf %179, %171 : vector<16x128xf32>
    %181 = arith.addf %168, %180 : vector<16x128xf32>
    %c0_12 = arith.constant 0 : index
    %c0_13 = arith.constant 0 : index
    %c0_14 = arith.constant 0 : index
    %c0_15 = arith.constant 0 : index
    %182 = vector.load %arg3[%c0_12, %c0_13, %c0_14, %c0_15] : memref<1x2x16x128xf32, #tpu.memory_space<vmem>>, vector<1x1x16x128xf32>
    %183 = vector.shape_cast %182 : vector<1x1x16x128xf32> to vector<16x128xf32>
    %184 = vector.shape_cast %176 : vector<16x128xf32> to vector<1x1x16x128xf32>
    tpu.vector_store %arg3[%c0_12, %c0_13, %c0_14, %c0_15], %184 {strides = array<i32>} : memref<1x2x16x128xf32, #tpu.memory_space<vmem>>, vector<1x1x16x128xf32>,
    %c0_16 = arith.constant 0 : index
    %c1_17 = arith.constant 1 : index
    %c0_18 = arith.constant 0 : index
    %c0_19 = arith.constant 0 : index
    %185 = vector.load %arg3[%c0_16, %c1_17, %c0_18, %c0_19] : memref<1x2x16x128xf32, #tpu.memory_space<vmem>>, vector<1x1x16x128xf32>
    %186 = vector.shape_cast %185 : vector<1x1x16x128xf32> to vector<16x128xf32>
    %187 = vector.shape_cast %181 : vector<16x128xf32> to vector<1x1x16x128xf32>
    tpu.vector_store %arg3[%c0_16, %c1_17, %c0_18, %c0_19], %187 {strides = array<i32>} : memref<1x2x16x128xf32, #tpu.memory_space<vmem>>, vector<1x1x16x128xf32>,
    return
  }
  func.func @transform_0(%arg0: i32, %arg1: i32) -> (i32, i32) {
    %c0_i32 = arith.constant 0 : i32
    %c0_i32_0 = arith.constant 0 : i32
    %c0_i32_1 = arith.constant 0 : i32
    return %c0_i32, %c0_i32_0 : i32, i32
  }
  func.func @transform_1(%arg0: i32, %arg1: i32) -> (i32, i32, i32, i32) {
    %c0_i32 = arith.constant 0 : i32
    %c0_i32_0 = arith.constant 0 : i32
    %c0_i32_1 = arith.constant 0 : i32
    return %arg0, %c0_i32, %arg1, %c0_i32_0 : i32, i32, i32, i32
  }
}

</mosaic_0001>

<llo_original>
// kernel: tpu_custom_call.1
$region0: #{tpu_custom_call.1}
  #allocation0 [shape = 'u32[]', space=smem, size = 0x4, offset = 0x4, fixed_abs, tag = 'smem constant byte address 0x4 - core index']
  #allocation1 [shape = 'u32[144,128]{1,0:T(1,128)}', space=vmem, size = 0x12000, scoped, tag = 'internal scratch']
  %s0 = inlined_call_operand.hbm [shape: f32[2,24], index: 0, kind: input, shape index: {}]
  %s1 = inlined_call_operand.hbm [shape: f32[2,2,16,128], index: 1, kind: output, shape index: {}]
  %s2 = sld [smem:[#allocation0]]
  $region41: #{tpu_custom_call.1} parent=0
    _
  %s4 = ssub.s32 1, %s2
  %s5 = scalar_select 0, %s4, %s2
  $region1: #{tpu_custom_call.1} parent=0
    #allocation2 [shape = 'u8[1024]{0}', space=smem, size = 0x400, scoped, tag = 'input window, operand 0, single buffered']
    #allocation3 [shape = 's32[2]{0}', space=sflag, size = 0x8, scoped, tag = 'scoped memory for tpu_custom_call.1']
    #allocation4 [shape = 's32[2]{0}', space=sflag, size = 0x8, scoped, tag = 'scoped memory for tpu_custom_call.1']
    #allocation5 [shape = 'u8[32768]{0}', space=vmem, size = 0x8000, scoped, tag = 'output window, operand 0']
    %6 = vsyncpa [#allocation4], 0
    %7 = vsyncpa [#allocation3], 0
    %s8 = scalar_lea.sflag [#allocation3], 1
    %9 = vsyncpa %s8, 0
    loop: start=0, step=1, limit=4
    $region2: #{tpu_custom_call.1} parent=1 // loop_pre_header
      _
    $region3: #{tpu_custom_call.1} parent=1 // loop_header
      %s11 = sphi 0, %s15
      %p12 = scmp.ge.s32.totalorder %s11, 4
      %s18 = sphi 0, %s30
      %s19 = sphi 0, %s26
      %s20 = sphi 0, %s18
      %s21 = sphi 0, %s19
      %s22 = sphi 0, %s20
      %s23 = sphi 0, %s21
      %s31 = sphi 0, %s31
      %s33 = sphi 0, %s31
      %s34 = sphi 0, %s33
      %s48 = sphi 0, %s34
      %s56 = sphi 0, %s58
      %s59 = sphi 0, %s56
      %s60 = sphi 0, %s59
      %s76 = sphi 0, %s60
    $region4: #{tpu_custom_call.1} parent=1 // loop_header_branch
      %14 = sbr.rel (%p12) target = $region8
    $region5: #{tpu_custom_call.1} parent=1 // loop_body
      %s16 = ssub.s32 %s11, 1
      %s17 = ssub.s32 %s11, 2
      %s24 = sadd.s32 1, %s19
      %p25 = scmp.ge.s32.totalorder %s24, 1
      %s26 = scalar_select %p25, 0, %s24
      %s27 = sadd.s32 1, %s18
      %s28 = scalar_select %p25, %s27, %s18
      %p29 = scmp.ge.s32.totalorder %s28, 2
      %s30 = scalar_select %p29, 0, %s28
      %s32 = sadd.s32 %s31, 1
      %p35 = scmp.eq.s32.totalorder %s11, 1
      %p36 = scmp.ne.s32.totalorder %s31, %s33
      %p37 = scmp.eq.s32.totalorder %s11, 0
      %p38 = por %p36, %p37
      %p39 = scmp.ne.s32.totalorder %s31, %s33
      %p40 = scmp.eq.s32.totalorder %s16, 1
      %p41 = por %p39, %p40
      %p42 = scmp.ne.s32.totalorder %s33, %s34
      %p43 = scmp.eq.s32.totalorder %s16, 0
      %p44 = por %p42, %p43
      %p45 = scmp.ne.s32.totalorder %s33, %s34
      %p46 = scmp.eq.s32.totalorder %s17, 1
      %p47 = por %p45, %p46
      %p49 = scmp.ne.s32.totalorder %s34, %s48
      %p50 = scmp.eq.s32.totalorder %s17, 0
      %p51 = por %p49, %p50
      %s52 = ssub.s32 %s18, %s30
      %s53 = ssub.s32 %s19, %s26
      %s54 = sor.u32 %s52, %s53
      %p55 = scmp.eq.s32.totalorder %s54, 0
      %s57 = sadd.s32 %s56, 1
      %s58 = scalar_select %p55, %s56, %s57
      %p61 = pneg %p55
      %p62 = scmp.eq.s32.totalorder %s11, 1
      %p63 = por %p61, %p62
      %p64 = scmp.ne.s32.totalorder %s56, %s59
      %p65 = scmp.eq.s32.totalorder %s11, 0
      %p66 = por %p64, %p65
      %p67 = scmp.ne.s32.totalorder %s56, %s59
      %p68 = scmp.eq.s32.totalorder %s16, 1
      %p69 = por %p67, %p68
      %p70 = scmp.ne.s32.totalorder %s59, %s60
      %p71 = scmp.eq.s32.totalorder %s16, 0
      %p72 = por %p70, %p71
      %p73 = scmp.ne.s32.totalorder %s59, %s60
      %p74 = scmp.eq.s32.totalorder %s17, 1
      %p75 = por %p73, %p74
      %p77 = scmp.ne.s32.totalorder %s60, %s76
      %p78 = scmp.eq.s32.totalorder %s17, 0
      %p79 = por %p77, %p78
      %p80 = scmp.le.s32.totalorder 1, %s11
      %p81 = scmp.lt.s32.totalorder %s11, 3
      %p82 = pnand %p80, %p81
      %p83 = pneg %p82
      // Predicated region
      $region9: #{tpu_custom_call.1} parent=5 // pred_check
        _
      $region10: #{tpu_custom_call.1} parent=5 // pred_check_branch
        %85 = sbr.rel (%p82) target = $region12
      $region11: #{tpu_custom_call.1} parent=5 // pred_region
        %s86 = ssub.s32 %s11, 1
        // Predicated region
        $region13: #{tpu_custom_call.1} parent=11 // pred_check
          %p87 = pneg %p44
        $region14: #{tpu_custom_call.1} parent=11 // pred_check_branch
          %89 = sbr.rel (%p87) target = $region16
        $region15: #{tpu_custom_call.1} parent=11 // pred_region
          %s91 = ssub.s32 32, 32
          %92 = vsyncadd [#allocation4], %s91
          %95 = dma.hbm_to_smem %s0, 32, [#allocation2], [#allocation4]
        $region16: #{tpu_custom_call.1} parent=11 // pred_fallthru
          _
      $region12: #{tpu_custom_call.1} parent=5 // pred_fallthru
        _
      %p96 = scmp.lt.s32.totalorder %s11, 2
      // Predicated region
      $region17: #{tpu_custom_call.1} parent=5 // pred_check
        %p97 = pneg %p96
      $region18: #{tpu_custom_call.1} parent=5 // pred_check_branch
        %99 = sbr.rel (%p97) target = $region20
      $region19: #{tpu_custom_call.1} parent=5 // pred_region
        _
      $region20: #{tpu_custom_call.1} parent=5 // pred_fallthru
        _
      %p100 = scmp.le.s32.totalorder 1, %s11
      %p101 = scmp.lt.s32.totalorder %s11, 3
      %p102 = pnand %p100, %p101
      %p103 = pneg %p102
      // Predicated region
      $region21: #{tpu_custom_call.1} parent=5 // pred_check
        _
      $region22: #{tpu_custom_call.1} parent=5 // pred_check_branch
        %105 = sbr.rel (%p102) target = $region24
      $region23: #{tpu_custom_call.1} parent=5 // pred_region
        %s106 = ssub.s32 %s11, 1
        // Predicated region
        $region25: #{tpu_custom_call.1} parent=23 // pred_check
          %p107 = pneg %p44
        $region26: #{tpu_custom_call.1} parent=23 // pred_check_branch
          %109 = sbr.rel (%p107) target = $region28
        $region27: #{tpu_custom_call.1} parent=23 // pred_region
          %110 = dma.done [#allocation4], 32
        $region28: #{tpu_custom_call.1} parent=23 // pred_fallthru
          _
        %111 = sfence
        %p112 = pneg %p44
        %p113 = pneg %p41
        %p114 = pneg %p72
        %p115 = pneg %p69
        %s116 = sand.u32 %s59, 1
        %s117 = scalar_lea.sflag [#allocation3], %s116
        %s118 = sand.u32 %s59, 1
        %s119 = smul.addr %s118, 32
        %s120 = scalar_lea.vmem [#allocation5], %s119
        %s121 = smul.u32 2, %s21
        %s122 = smul.u32 %s21, 16
        %v123 = vlaneseq
        %v124 = vshrl.u32 %v123, 7
        %v125 = vadd.s32 %v124, 8
        %v126 = vstv %s122
        %v127 = vadd.s32 %v126, %v124
        %v128 = vadd.s32 %v126, %v125
        %v129 = vcvt.s32.f32 %v127
        %v130 = vcvt.s32.f32 %v128
        %v131 = vlaneseq
        %v132 = vand.u32 %v131, 127
        %v133 = vcvt.s32.f32 %v132
        %v134 = vmul.f32 %v129, 0.13333334
        %v135 = vmul.f32 %v130, 0.13333334
        %v136 = vsub.f32 %v134, 1.0
        %v137 = vsub.f32 %v135, 1.0
        %v138 = vmul.f32 %v133, 0.015748031
        %v139 = vsub.f32 %v138, 1.0
        %s140 = smul.u32 %s20, 128
        %s141 = sadd.s32 %s140, 9
        %s142 = sld [smem:[#allocation2 + %s141]]
        %s143 = sadd.s32 %s140, 10
        %s144 = sld [smem:[#allocation2 + %s143]]
        %v145 = vstv %s144
        %v146 = vmul.f32 %v145, %v139
        %v147 = vstv %s142
        %v148 = vadd.f32 %v147, %v146
        %s149 = sadd.s32 %s140, 11
        %s150 = sld [smem:[#allocation2 + %s149]]
        %v151 = vstv %s150
        %v152 = vmul.f32 %v151, %v136
        %v153 = vmul.f32 %v151, %v137
        %v154 = vadd.f32 %v148, %v152
        %v155 = vadd.f32 %v148, %v153
        %s156 = sadd.s32 %s140, 21
        %s157 = sld [smem:[#allocation2 + %s156]]
        %s158 = sadd.s32 %s140, 22
        %s159 = sld [smem:[#allocation2 + %s158]]
        %v160 = vstv %s159
        %v161 = vmul.f32 %v160, %v139
        %v162 = vstv %s157
        %v163 = vadd.f32 %v162, %v161
        %s164 = sadd.s32 %s140, 23
        %s165 = sld [smem:[#allocation2 + %s164]]
        %v166 = vstv %s165
        %v167 = vmul.f32 %v166, %v136
        %v168 = vmul.f32 %v166, %v137
        %v169 = vadd.f32 %v163, %v167
        %v170 = vadd.f32 %v163, %v168
        %v171 = vsub.f32 %v139, -1.0
        %v172 = vmul.f32 %v171, %v171
        %v173 = vadd.f32 %v172, 1e-30
        %v174 = vmul.f32 %v139, %v139
        %v175 = vadd.f32 %v174, 1e-30
        %v176 = vsub.f32 %v139, 1.0
        %v177 = vmul.f32 %v176, %v176
        %v178 = vadd.f32 %v177, 1e-30
        %v179 = vsub.f32 %v136, -1.0
        %v180 = vsub.f32 %v137, -1.0
        %v181 = vmul.f32 %v179, %v179
        %v182 = vmul.f32 %v180, %v180
        %v183 = vmul.f32 %v136, %v136
        %v184 = vmul.f32 %v137, %v137
        %v185 = vsub.f32 %v136, 1.0
        %v186 = vsub.f32 %v137, 1.0
        %v187 = vmul.f32 %v185, %v185
        %v188 = vmul.f32 %v186, %v186
        %v189 = vadd.f32 %v173, %v181
        %v190 = vadd.f32 %v173, %v182
        %v191 = vlog2.pop %v189
        %v192 = vmul.f32 %v191, 0.6931472
        %v193 = vlog2.pop %v190
        %v194 = vmul.f32 %v193, 0.6931472
        %v195 = vmul.f32 %v189, %v192
        %v196 = vmul.f32 %v190, %v194
        %s197 = sld [smem:[#allocation2 + %s140]]
        %v198 = vstv %s197
        %v199 = vmul.f32 %v198, %v195
        %v200 = vmul.f32 %v198, %v196
        %v201 = vadd.f32 %v154, %v199
        %v202 = vadd.f32 %v155, %v200
        %s203 = sadd.s32 %s140, 12
        %s204 = sld [smem:[#allocation2 + %s203]]
        %v205 = vstv %s204
        %v206 = vmul.f32 %v205, %v195
        %v207 = vmul.f32 %v205, %v196
        %v208 = vadd.f32 %v169, %v206
        %v209 = vadd.f32 %v170, %v207
        %v210 = vadd.f32 %v173, %v183
        %v211 = vadd.f32 %v173, %v184
        %v212 = vlog2.pop %v210
        %v213 = vmul.f32 %v212, 0.6931472
        %v214 = vlog2.pop %v211
        %v215 = vmul.f32 %v214, 0.6931472
        %v216 = vmul.f32 %v210, %v213
        %v217 = vmul.f32 %v211, %v215
        %s218 = sadd.s32 %s140, 1
        %s219 = sld [smem:[#allocation2 + %s218]]
        %v220 = vstv %s219
        %v221 = vmul.f32 %v220, %v216
        %v222 = vmul.f32 %v220, %v217
        %v223 = vadd.f32 %v201, %v221
        %v224 = vadd.f32 %v202, %v222
        %s225 = sadd.s32 %s140, 13
        %s226 = sld [smem:[#allocation2 + %s225]]
        %v227 = vstv %s226
        %v228 = vmul.f32 %v227, %v216
        %v229 = vmul.f32 %v227, %v217
        %v230 = vadd.f32 %v208, %v228
        %v231 = vadd.f32 %v209, %v229
        %v232 = vadd.f32 %v173, %v187
        %v233 = vadd.f32 %v173, %v188
        %v234 = vlog2.pop %v232
        %v235 = vmul.f32 %v234, 0.6931472
        %v236 = vlog2.pop %v233
        %v237 = vmul.f32 %v236, 0.6931472
        %v238 = vmul.f32 %v232, %v235
        %v239 = vmul.f32 %v233, %v237
        %s240 = sadd.s32 %s140, 2
        %s241 = sld [smem:[#allocation2 + %s240]]
        %v242 = vstv %s241
        %v243 = vmul.f32 %v242, %v238
        %v244 = vmul.f32 %v242, %v239
        %v245 = vadd.f32 %v223, %v243
        %v246 = vadd.f32 %v224, %v244
        %s247 = sadd.s32 %s140, 14
        %s248 = sld [smem:[#allocation2 + %s247]]
        %v249 = vstv %s248
        %v250 = vmul.f32 %v249, %v238
        %v251 = vmul.f32 %v249, %v239
        %v252 = vadd.f32 %v230, %v250
        %v253 = vadd.f32 %v231, %v251
        %v254 = vadd.f32 %v175, %v181
        %v255 = vadd.f32 %v175, %v182
        %v256 = vlog2.pop %v254
        %v257 = vmul.f32 %v256, 0.6931472
        %v258 = vlog2.pop %v255
        %v259 = vmul.f32 %v258, 0.6931472
        %v260 = vmul.f32 %v254, %v257
        %v261 = vmul.f32 %v255, %v259
        %s262 = sadd.s32 %s140, 3
        %s263 = sld [smem:[#allocation2 + %s262]]
        %v264 = vstv %s263
        %v265 = vmul.f32 %v264, %v260
        %v266 = vmul.f32 %v264, %v261
        %v267 = vadd.f32 %v245, %v265
        %v268 = vadd.f32 %v246, %v266
        %s269 = sadd.s32 %s140, 15
        %s270 = sld [smem:[#allocation2 + %s269]]
        %v271 = vstv %s270
        %v272 = vmul.f32 %v271, %v260
        %v273 = vmul.f32 %v271, %v261
        %v274 = vadd.f32 %v252, %v272
        %v275 = vadd.f32 %v253, %v273
        %v276 = vadd.f32 %v175, %v183
        %v277 = vadd.f32 %v175, %v184
        %v278 = vlog2.pop %v276
        %v279 = vmul.f32 %v278, 0.6931472
        %v280 = vlog2.pop %v277
        %v281 = vmul.f32 %v280, 0.6931472
        %v282 = vmul.f32 %v276, %v279
        %v283 = vmul.f32 %v277, %v281
        %s284 = sadd.s32 %s140, 4
        %s285 = sld [smem:[#allocation2 + %s284]]
        %v286 = vstv %s285
        %v287 = vmul.f32 %v286, %v282
        %v288 = vmul.f32 %v286, %v283
        %v289 = vadd.f32 %v267, %v287
        %v290 = vadd.f32 %v268, %v288
        %s291 = sadd.s32 %s140, 16
        %s292 = sld [smem:[#allocation2 + %s291]]
        %v293 = vstv %s292
        %v294 = vmul.f32 %v293, %v282
        %v295 = vmul.f32 %v293, %v283
        %v296 = vadd.f32 %v274, %v294
        %v297 = vadd.f32 %v275, %v295
        %v298 = vadd.f32 %v175, %v187
        %v299 = vadd.f32 %v175, %v188
        %v300 = vlog2.pop %v298
        %v301 = vmul.f32 %v300, 0.6931472
        %v302 = vlog2.pop %v299
        %v303 = vmul.f32 %v302, 0.6931472
        %v304 = vmul.f32 %v298, %v301
        %v305 = vmul.f32 %v299, %v303
        %s306 = sadd.s32 %s140, 5
        %s307 = sld [smem:[#allocation2 + %s306]]
        %v308 = vstv %s307
        %v309 = vmul.f32 %v308, %v304
        %v310 = vmul.f32 %v308, %v305
        %v311 = vadd.f32 %v289, %v309
        %v312 = vadd.f32 %v290, %v310
        %s313 = sadd.s32 %s140, 17
        %s314 = sld [smem:[#allocation2 + %s313]]
        %v315 = vstv %s314
        %v316 = vmul.f32 %v315, %v304
        %v317 = vmul.f32 %v315, %v305
        %v318 = vadd.f32 %v296, %v316
        %v319 = vadd.f32 %v297, %v317
        %v320 = vadd.f32 %v178, %v181
        %v321 = vadd.f32 %v178, %v182
        %v322 = vlog2.pop %v320
        %v323 = vmul.f32 %v322, 0.6931472
        %v324 = vlog2.pop %v321
        %v325 = vmul.f32 %v324, 0.6931472
        %v326 = vmul.f32 %v320, %v323
        %v327 = vmul.f32 %v321, %v325
        %s328 = sadd.s32 %s140, 6
        %s329 = sld [smem:[#allocation2 + %s328]]
        %v330 = vstv %s329
        %v331 = vmul.f32 %v330, %v326
        %v332 = vmul.f32 %v330, %v327
        %v333 = vadd.f32 %v311, %v331
        %v334 = vadd.f32 %v312, %v332
        %s335 = sadd.s32 %s140, 18
        %s336 = sld [smem:[#allocation2 + %s335]]
        %v337 = vstv %s336
        %v338 = vmul.f32 %v337, %v326
        %v339 = vmul.f32 %v337, %v327
        %v340 = vadd.f32 %v318, %v338
        %v341 = vadd.f32 %v319, %v339
        %v342 = vadd.f32 %v178, %v183
        %v343 = vadd.f32 %v178, %v184
        %v344 = vlog2.pop %v342
        %v345 = vmul.f32 %v344, 0.6931472
        %v346 = vlog2.pop %v343
        %v347 = vmul.f32 %v346, 0.6931472
        %v348 = vmul.f32 %v342, %v345
        %v349 = vmul.f32 %v343, %v347
        %s350 = sadd.s32 %s140, 7
        %s351 = sld [smem:[#allocation2 + %s350]]
        %v352 = vstv %s351
        %v353 = vmul.f32 %v352, %v348
        %v354 = vmul.f32 %v352, %v349
        %v355 = vadd.f32 %v333, %v353
        %v356 = vadd.f32 %v334, %v354
        %s357 = sadd.s32 %s140, 19
        %s358 = sld [smem:[#allocation2 + %s357]]
        %v359 = vstv %s358
        %v360 = vmul.f32 %v359, %v348
        %v361 = vmul.f32 %v359, %v349
        %v362 = vadd.f32 %v340, %v360
        %v363 = vadd.f32 %v341, %v361
        %v364 = vadd.f32 %v178, %v187
        %v365 = vadd.f32 %v178, %v188
        %v366 = vlog2.pop %v364
        %v367 = vmul.f32 %v366, 0.6931472
        %v368 = vlog2.pop %v365
        %v369 = vmul.f32 %v368, 0.6931472
        %v370 = vmul.f32 %v364, %v367
        %v371 = vmul.f32 %v365, %v369
        %s372 = sadd.s32 %s140, 8
        %s373 = sld [smem:[#allocation2 + %s372]]
        %v374 = vstv %s373
        %v375 = vmul.f32 %v374, %v370
        %v376 = vmul.f32 %v374, %v371
        %v377 = vadd.f32 %v355, %v375
        %v378 = vadd.f32 %v356, %v376
        %s379 = sadd.s32 %s140, 20
        %s380 = sld [smem:[#allocation2 + %s379]]
        %v381 = vstv %s380
        %v382 = vmul.f32 %v381, %v370
        %v383 = vmul.f32 %v381, %v371
        %v384 = vadd.f32 %v362, %v382
        %v385 = vadd.f32 %v363, %v383
        %386 = vst [vmem:[%s120] sm:$0xff] %v377
        %387 = vst [vmem:[%s120 + $0x8] sm:$0xff] %v378
        %s388 = scalar_lea.vmem %s120, 16 [#allocation5]
        %389 = vst [vmem:[%s388] sm:$0xff] %v384
        %390 = vst [vmem:[%s388 + $0x8] sm:$0xff] %v385
        %s391 = sand.u32 %s59, 1
        %s392 = scalar_lea.sflag [#allocation3], %s391
        %s393 = sand.u32 %s59, 1
        %s394 = smul.addr %s393, 32
        %s395 = scalar_lea.vmem [#allocation5], %s394
        // Predicated region
        $region29: #{tpu_custom_call.1} parent=23 // pred_check
          %p396 = pneg %p69
        $region30: #{tpu_custom_call.1} parent=23 // pred_check_branch
          %398 = sbr.rel (%p396) target = $region32
        $region31: #{tpu_custom_call.1} parent=23 // pred_region
          %s399 = smul.u32 2, %s21
          %s401 = ssub.s32 512, 512
          %402 = vsyncadd %s392, %s401
          %s403 = smul.addr %s20, 4
          %s404 = sadd.s32 %s399, %s403
          %s405 = smul.addr %s404, 128
          %s406 = scalar_lea.hbm %s1, %s405
          %s407 = sshll.u32 %s395, 4
          %s408 = int_to_ptr.vmem [resolvable:$true] %s407
          %413 = dma.vmem_to_hbm [thread:$0]  %s408, 512, %s406, %s392, 128, 128, 8
        $region32: #{tpu_custom_call.1} parent=23 // pred_fallthru
          _
      $region24: #{tpu_custom_call.1} parent=5 // pred_fallthru
        _
      %p414 = scmp.le.s32.totalorder 2, %s11
      // Predicated region
      $region33: #{tpu_custom_call.1} parent=5 // pred_check
        %p415 = pneg %p414
      $region34: #{tpu_custom_call.1} parent=5 // pred_check_branch
        %417 = sbr.rel (%p415) target = $region36
      $region35: #{tpu_custom_call.1} parent=5 // pred_region
        %s418 = ssub.s32 %s11, 2
        // Predicated region
        $region37: #{tpu_custom_call.1} parent=35 // pred_check
          %p419 = pneg %p75
        $region38: #{tpu_custom_call.1} parent=35 // pred_check_branch
          %421 = sbr.rel (%p419) target = $region40
        $region39: #{tpu_custom_call.1} parent=35 // pred_region
          %s422 = sand.u32 %s60, 1
          %s423 = scalar_lea.sflag [#allocation3], %s422
          %s424 = sand.u32 %s60, 1
          %s425 = smul.addr %s424, 32
          %s426 = scalar_lea.vmem [#allocation5], %s425
          %427 = dma.done %s423, 512
        $region40: #{tpu_custom_call.1} parent=35 // pred_fallthru
          _
      $region36: #{tpu_custom_call.1} parent=5 // pred_fallthru
        _
    $region6: #{tpu_custom_call.1} parent=1 // loop_footer
      %s15 = sadd.s32 1, %s11
    $region7: #{tpu_custom_call.1} parent=1 // loop_footer_branch
      %10 = sbr.rel target = $region3
    $region8: #{tpu_custom_call.1} parent=1 // loop_exit
      _
    %428 = vsyncpa [#allocation3], 1
    %s429 = scalar_lea.sflag [#allocation3], 1
    %430 = vsyncpa %s429, 1
    %431 = vsyncpa [#allocation4], 1
    %s432 = scalar_lea.sflag [#allocation4], 1
    %433 = vsyncpa %s432, 1

</llo_original>
